<compile_context>
chip_gen: v5e
topology: v5e:2x2
jax: 0.10.0
libtpu: 0.0.40
codegen_flags: <defaults>
</compile_context>

<pallas_src>
import jax
import jax.numpy as jnp
from jax.experimental import pallas as pl
from jax.experimental.pallas import tpu as pltpu


# --------------------------------------------------------------------------- #
# Kernels
# --------------------------------------------------------------------------- #
def _critic_kernel_fused(s_ref, a_ref, w1s_ref, w1a_ref, w2_ref, w3_ref, out_ref):
    """Twin-Q heads fused into wide matmuls (used when 2*hidden <= one MXU tile).

    Layer 3 is an MXU matmul against a block-structured (2H, 2) matrix, so the
    result lands pre-packed as a lane-dense (Bt, 2) tile (col 0 = q1, col 1 = q2).
    """
    cdt = w2_ref.dtype  # MXU operand dtype (f32, or bf16 on v6e/v7x)

    # Layer 1:  concat(s, a) @ W1f  ==  s @ W1f[:s_dim] + a @ W1f[s_dim:]
    h1 = jnp.dot(s_ref[...].astype(cdt), w1s_ref[...],
                 preferred_element_type=jnp.float32)
    h1 = h1 + jnp.dot(a_ref[...].astype(cdt), w1a_ref[...],
                      preferred_element_type=jnp.float32)
    h1 = jnp.abs(jnp.tanh(h1))                     # Abs(): |tanh(x)|, f32

    # Layer 2 (block-diagonal fused): (Bt, 2H) @ (2H, 2H)
    h2 = jnp.dot(h1.astype(cdt), w2_ref[...], preferred_element_type=jnp.float32)
    h2 = jnp.abs(jnp.tanh(h2))

    # Layer 3: (Bt, 2H) @ (2H, 2) block matrix -> packed (Bt, 2) output.
    out = jnp.dot(h2.astype(cdt), w3_ref[...], preferred_element_type=jnp.float32)
    out_ref[...] = out.astype(out_ref.dtype)


def _critic_kernel_split(s_ref, a_ref,
                         w1s1_ref, w1a1_ref, w21_ref, w31_ref,
                         w1s2_ref, w1a2_ref, w22_ref, w32_ref,
                         out_ref):
    """Per-head path for large hidden (2*hidden > one MXU tile): avoids the
    2x MXU-FLOP / 4x weight-VMEM cost of the zero blocks in a block-diagonal
    W2.  Each head's W3 is pre-padded to (H, 2) with the other column zero, so
    the sum of the two head outputs is already the packed (Bt, 2) result."""
    cdt = w21_ref.dtype
    s = s_ref[...].astype(cdt)
    a = a_ref[...].astype(cdt)

    def head(w1s, w1a, w2, w3):
        h1 = jnp.dot(s, w1s[...], preferred_element_type=jnp.float32)
        h1 = h1 + jnp.dot(a, w1a[...], preferred_element_type=jnp.float32)
        h1 = jnp.abs(jnp.tanh(h1))
        h2 = jnp.dot(h1.astype(cdt), w2[...], preferred_element_type=jnp.float32)
        h2 = jnp.abs(jnp.tanh(h2))
        return jnp.dot(h2.astype(cdt), w3[...], preferred_element_type=jnp.float32)

    out = head(w1s1_ref, w1a1_ref, w21_ref, w31_ref) \
        + head(w1s2_ref, w1a2_ref, w22_ref, w32_ref)
    out_ref[...] = out.astype(out_ref.dtype)


def _critic_kernel_fused_fm(st_ref, at_ref, w1st_ref, w1at_ref, w2t_ref, w3t_ref,
                            out_ref):
    """Feature-major (batch-on-lanes) variant: inputs are s.T (s_dim, Bt) and
    a.T (a_dim, Bt).  Every DMA is lane-dense and the (2, Bt) output stores are
    unmasked.  Math: y.T = W.T @ x.T."""
    cdt = w2t_ref.dtype
    h1 = jnp.dot(w1st_ref[...], st_ref[...].astype(cdt),
                 preferred_element_type=jnp.float32)
    h1 = h1 + jnp.dot(w1at_ref[...], at_ref[...].astype(cdt),
                      preferred_element_type=jnp.float32)
    h1 = jnp.abs(jnp.tanh(h1))
    h2 = jnp.dot(w2t_ref[...], h1.astype(cdt), preferred_element_type=jnp.float32)
    h2 = jnp.abs(jnp.tanh(h2))
    out = jnp.dot(w3t_ref[...], h2.astype(cdt), preferred_element_type=jnp.float32)
    out_ref[...] = out.astype(out_ref.dtype)


# --------------------------------------------------------------------------- #
# Wrappers
# --------------------------------------------------------------------------- #
def _round_up(x, m):
    return ((x + m - 1) // m) * m


def _batch_tiling(batch, cap, align):
    """(tile, padded_batch).  Single grid step when batch <= cap; otherwise
    fixed cap-sized tiles with the batch padded up (tail rows are zero-padded
    by the wrapper and sliced away afterwards)."""
    cap = max(align, cap - cap % align)
    b_aligned = _round_up(batch, align)
    if b_aligned <= cap:
        return b_aligned, b_aligned
    return cap, _round_up(batch, cap)


def _dim_semantics(core_parallel):
    # CORE_PARALLEL shards the batch axis across v7x's 2 TensorCores; plain
    # "parallel" is the safe default on single-TC chips (v5e/v6e).
    return (pltpu.CORE_PARALLEL,) if core_parallel else ("parallel",)


def _maybe_pad_rows(x, rows):
    if x.shape[0] == rows:
        return x
    return jnp.pad(x, ((0, rows - x.shape[0]), (0, 0)))


def critic_forward_packed(s, a, fused, *, batch_block=4096, core_parallel=False):
    """Fused twin-Q forward.  Returns a packed (B, 2) float32 array
    (column 0 = q1, column 1 = q2): one lane-dense writeback, no wrapper
    slicing.  `fused` comes from fuse_critic_params()."""
    B, s_dim = s.shape
    a_dim = a.shape[1]

    # batch_block=4096 keeps double-buffered s/a/out blocks + f32 h1/h2
    # intermediates well under the 32 MiB scoped-VMEM default (and v7x's
    # 64 MiB physical VMEM) while amortizing the ~0.35us per-grid-step cost.
    bt, b_pad = _batch_tiling(B, batch_block, 8)
    grid = (b_pad // bt,)
    s_p = _maybe_pad_rows(s, b_pad)
    a_p = _maybe_pad_rows(a, b_pad)

    compiler_params = pltpu.CompilerParams(
        dimension_semantics=_dim_semantics(core_parallel))

    if fused["layout"] == "fused":
        two_h = fused["w2"].shape[0]
        out = pl.pallas_call(
            _critic_kernel_fused,
            out_shape=jax.ShapeDtypeStruct((b_pad, 2), jnp.float32),
            grid_spec=pltpu.PrefetchScalarGridSpec(
                num_scalar_prefetch=0,
                grid=grid,
                in_specs=[
                    pl.BlockSpec((bt, s_dim), lambda i: (i, 0)),      # s
                    pl.BlockSpec((bt, a_dim), lambda i: (i, 0)),      # a
                    pl.BlockSpec((s_dim, two_h), lambda i: (0, 0)),   # W1 rows for s
                    pl.BlockSpec((a_dim, two_h), lambda i: (0, 0)),   # W1 rows for a
                    pl.BlockSpec((two_h, two_h), lambda i: (0, 0)),   # block-diag W2
                    pl.BlockSpec((two_h, 2), lambda i: (0, 0)),       # (2H, 2) W3 block
                ],
                out_specs=pl.BlockSpec((bt, 2), lambda i: (i, 0)),
            ),
            compiler_params=compiler_params,
        )(s_p, a_p, fused["w1_s"], fused["w1_a"], fused["w2"], fused["w3"])
    else:  # "split": per-head weights for large hidden
        hidden = fused["q1_w2"].shape[0]
        w_specs = [
            pl.BlockSpec((s_dim, hidden), lambda i: (0, 0)),
            pl.BlockSpec((a_dim, hidden), lambda i: (0, 0)),
            pl.BlockSpec((hidden, hidden), lambda i: (0, 0)),
            pl.BlockSpec((hidden, 2), lambda i: (0, 0)),
        ]
        out = pl.pallas_call(
            _critic_kernel_split,
            out_shape=jax.ShapeDtypeStruct((b_pad, 2), jnp.float32),
            grid_spec=pltpu.PrefetchScalarGridSpec(
                num_scalar_prefetch=0,
                grid=grid,
                in_specs=[
                    pl.BlockSpec((bt, s_dim), lambda i: (i, 0)),
                    pl.BlockSpec((bt, a_dim), lambda i: (i, 0)),
                ] + w_specs + w_specs,
                out_specs=pl.BlockSpec((bt, 2), lambda i: (i, 0)),
            ),
            compiler_params=compiler_params,
        )(s_p, a_p,
          fused["q1_w1_s"], fused["q1_w1_a"], fused["q1_w2"], fused["q1_w3"],
          fused["q2_w1_s"], fused["q2_w1_a"], fused["q2_w2"], fused["q2_w3"])

    return out if b_pad == B else out[:B]


def critic_forward(s, a, fused, *, batch_block=4096, core_parallel=False):
    """PyTorch-parity helper: returns (q1, q2), each (B, 1).
    Prefer critic_forward_packed() to avoid the two tiny wrapper slice ops."""
    out = critic_forward_packed(s, a, fused, batch_block=batch_block,
                                core_parallel=core_parallel)
    return out[:, 0:1], out[:, 1:2]


def critic_forward_feature_major(s_t, a_t, fused_fm, *, batch_block=4096,
                                 core_parallel=False):
    """Feature-major (batch-on-lanes) forward: s_t is (s_dim, B), a_t is
    (a_dim, B).  Returns packed (2, B) float32 (row 0 = q1, row 1 = q2).
    Every HBM transfer is lane-dense -> removes the 16x-64x lane-padding
    amplification of the batch-major layout for large B."""
    s_dim, B = s_t.shape
    a_dim = a_t.shape[0]
    two_h = fused_fm["w2_t"].shape[0]

    if B <= batch_block:
        bt, b_pad = B, B                     # block == full dim, one grid step
    else:
        bt = max(128, batch_block - batch_block % 128)
        b_pad = _round_up(B, bt)
    grid = (b_pad // bt,)
    if b_pad != B:
        s_t = jnp.pad(s_t, ((0, 0), (0, b_pad - B)))
        a_t = jnp.pad(a_t, ((0, 0), (0, b_pad - B)))

    out = pl.pallas_call(
        _critic_kernel_fused_fm,
        out_shape=jax.ShapeDtypeStruct((2, b_pad), jnp.float32),
        grid_spec=pltpu.PrefetchScalarGridSpec(
            num_scalar_prefetch=0,
            grid=grid,
            in_specs=[
                pl.BlockSpec((s_dim, bt), lambda i: (0, i)),      # s.T
                pl.BlockSpec((a_dim, bt), lambda i: (0, i)),      # a.T
                pl.BlockSpec((two_h, s_dim), lambda i: (0, 0)),   # W1s.T
                pl.BlockSpec((two_h, a_dim), lambda i: (0, 0)),   # W1a.T
                pl.BlockSpec((two_h, two_h), lambda i: (0, 0)),   # W2.T
                pl.BlockSpec((2, two_h), lambda i: (0, 0)),       # W3.T
            ],
            out_specs=pl.BlockSpec((2, bt), lambda i: (0, i)),
        ),
        compiler_params=pltpu.CompilerParams(
            dimension_semantics=_dim_semantics(core_parallel)),
    )(s_t, a_t, fused_fm["w1_s_t"], fused_fm["w1_a_t"],
      fused_fm["w2_t"], fused_fm["w3_t"])
    return out if b_pad == B else out[:, :B]


# --------------------------------------------------------------------------- #
# Parameters
# --------------------------------------------------------------------------- #
def init_params(key, s_dim, a_dim, hidden):
    """Per-head weights, shapes as in the PyTorch __init__.

    nn.Linear(in, out, bias=False) has weight (out, in); we store the transpose
    (in, out) so every layer is y = x @ W.
    """
    d_in = s_dim + a_dim
    keys = jax.random.split(key, 6)

    def w(k, fan_in, fan_out):
        bound = 1.0 / jnp.sqrt(fan_in)
        return jax.random.uniform(k, (fan_in, fan_out), jnp.float32, -bound, bound)

    return {
        "q1_w1": w(keys[0], d_in, hidden),
        "q1_w2": w(keys[1], hidden, hidden),
        "q1_w3": w(keys[2], hidden, 1),
        "q2_w1": w(keys[3], d_in, hidden),
        "q2_w2": w(keys[4], hidden, hidden),
        "q2_w3": w(keys[5], hidden, 1),
    }


def fuse_critic_params(raw, s_dim, dtype=jnp.float32, max_fused_width=256):
    """Build the kernel weights ONCE (not per call).

    Small hidden (2*hidden <= max_fused_width ~ one MXU tile): fuse the two
    heads (wide W1, block-diagonal W2, block-structured (2H, 2) W3).
    Large hidden: keep per-head weights (the zero blocks would double MXU
    FLOPs and quadruple W2 VMEM).

    dtype=jnp.bfloat16 is recommended on v6e/v7x (halves weight bytes and the
    MXU takes bf16 natively; accumulation + tanh stay f32).  Keep f32 on v5e.
    """
    hidden = raw["q1_w2"].shape[0]
    zcol = jnp.zeros((hidden, 1), jnp.float32)

    if 2 * hidden <= max_fused_width:
        w1f = jnp.concatenate([raw["q1_w1"], raw["q2_w1"]], axis=1)       # (d_in, 2H)
        zsq = jnp.zeros((hidden, hidden), jnp.float32)
        w2f = jnp.block([[raw["q1_w2"], zsq], [zsq, raw["q2_w2"]]])       # (2H, 2H)
        w3f = jnp.block([[raw["q1_w3"], zcol], [zcol, raw["q2_w3"]]])     # (2H, 2)
        return {
            "layout": "fused",
            "w1_s": w1f[:s_dim].astype(dtype),
            "w1_a": w1f[s_dim:].astype(dtype),
            "w2": w2f.astype(dtype),
            "w3": w3f.astype(dtype),
        }

    return {
        "layout": "split",
        "q1_w1_s": raw["q1_w1"][:s_dim].astype(dtype),
        "q1_w1_a": raw["q1_w1"][s_dim:].astype(dtype),
        "q1_w2": raw["q1_w2"].astype(dtype),
        "q1_w3": jnp.concatenate([raw["q1_w3"], zcol], axis=1).astype(dtype),
        "q2_w1_s": raw["q2_w1"][:s_dim].astype(dtype),
        "q2_w1_a": raw["q2_w1"][s_dim:].astype(dtype),
        "q2_w2": raw["q2_w2"].astype(dtype),
        "q2_w3": jnp.concatenate([zcol, raw["q2_w3"]], axis=1).astype(dtype),
    }


def fuse_critic_params_feature_major(raw, s_dim, dtype=jnp.float32):
    """Transposed (feature-major) fused weights for critic_forward_feature_major."""
    # TODO(synk): add a per-head (split) feature-major variant for configs where
    # 2*hidden exceeds one MXU tile; this fused form covers the module's
    # small/medium hidden sizes.
    hidden = raw["q1_w2"].shape[0]
    f = fuse_critic_params(raw, s_dim, dtype=jnp.float32,
                           max_fused_width=2 * hidden)  # force fused layout
    return {
        "w1_s_t": f["w1_s"].T.astype(dtype),   # (2H, s_dim)
        "w1_a_t": f["w1_a"].T.astype(dtype),   # (2H, a_dim)
        "w2_t": f["w2"].T.astype(dtype),       # (2H, 2H)
        "w3_t": f["w3"].T.astype(dtype),       # (2, 2H)
    }


# --------------------------------------------------------------------------- #
# Pure-JAX reference (mirrors the PyTorch forward exactly)
# --------------------------------------------------------------------------- #
def _reference_forward(s, a, raw):
    s_a = jnp.concatenate([s, a], axis=-1)

    def head(w1, w2, w3):
        h1 = jnp.abs(jnp.tanh(s_a @ w1))
        h2 = jnp.abs(jnp.tanh(h1 @ w2))
        return h2 @ w3

    return (head(raw["q1_w1"], raw["q1_w2"], raw["q1_w3"]),
            head(raw["q2_w1"], raw["q2_w2"], raw["q2_w3"]))


# --------------------------------------------------------------------------- #
if __name__ == "__main__":
    key = jax.random.PRNGKey(0)
    k_s, k_a, k_p, k_s2, k_a2, k_p2 = jax.random.split(key, 6)

    # ---- case 1: small shapes consistent with the module; fused twin heads --
    batch, s_dim, a_dim, hidden = 8, 8, 4, 32
    s = jax.random.normal(k_s, (batch, s_dim), jnp.float32)
    a = jax.random.normal(k_a, (batch, a_dim), jnp.float32)
    raw = init_params(k_p, s_dim, a_dim, hidden)
    q1_ref, q2_ref = _reference_forward(s, a, raw)

    fused = fuse_critic_params(raw, s_dim, dtype=jnp.float32)
    out = jax.block_until_ready(critic_forward_packed(s, a, fused))
    assert out.shape == (batch, 2)
    assert jnp.allclose(out[:, 0:1], q1_ref, atol=1e-4), "fused q1 mismatch"
    assert jnp.allclose(out[:, 1:2], q2_ref, atol=1e-4), "fused q2 mismatch"

    # PyTorch-parity (q1, q2) tuple helper
    q1, q2 = critic_forward(s, a, fused)
    q1, q2 = jax.block_until_ready((q1, q2))
    assert q1.shape == (batch, 1) and q2.shape == (batch, 1)

    # ---- case 2: batch not a multiple of 8 (pad + slice path) ---------------
    b_odd = 13
    s_odd = jax.random.normal(k_s2, (b_odd, s_dim), jnp.float32)
    a_odd = jax.random.normal(k_a2, (b_odd, a_dim), jnp.float32)
    out_odd = jax.block_until_ready(critic_forward_packed(s_odd, a_odd, fused))
    q1r, q2r = _reference_forward(s_odd, a_odd, raw)
    assert out_odd.shape == (b_odd, 2)
    assert jnp.allclose(out_odd[:, 0:1], q1r, atol=1e-4), "padded q1 mismatch"
    assert jnp.allclose(out_odd[:, 1:2], q2r, atol=1e-4), "padded q2 mismatch"

    # ---- case 3: feature-major (batch-on-lanes) layout ----------------------
    fused_fm = fuse_critic_params_feature_major(raw, s_dim, dtype=jnp.float32)
    out_fm = jax.block_until_ready(
        critic_forward_feature_major(s.T, a.T, fused_fm))
    assert out_fm.shape == (2, batch)
    assert jnp.allclose(out_fm[0:1].T, q1_ref, atol=1e-4), "fm q1 mismatch"
    assert jnp.allclose(out_fm[1:2].T, q2_ref, atol=1e-4), "fm q2 mismatch"

    # ---- case 4: bf16 weight/compute path (pins intended bf16 numerics) -----
    fused_bf16 = fuse_critic_params(raw, s_dim, dtype=jnp.bfloat16)
    out_bf16 = jax.block_until_ready(critic_forward_packed(s, a, fused_bf16))
    assert jnp.allclose(out_bf16[:, 0:1], q1_ref, atol=8e-2), "bf16 q1 mismatch"
    assert jnp.allclose(out_bf16[:, 1:2], q2_ref, atol=8e-2), "bf16 q2 mismatch"

    # ---- case 5: large hidden -> per-head (split) path ----------------------
    hidden_big = 160
    raw_big = init_params(k_p2, s_dim, a_dim, hidden_big)
    fused_big = fuse_critic_params(raw_big, s_dim, dtype=jnp.float32)
    assert fused_big["layout"] == "split"
    out_big = jax.block_until_ready(critic_forward_packed(s, a, fused_big))
    q1b, q2b = _reference_forward(s, a, raw_big)
    assert jnp.allclose(out_big[:, 0:1], q1b, atol=1e-4), "split q1 mismatch"
    assert jnp.allclose(out_big[:, 1:2], q2b, atol=1e-4), "split q2 mismatch"

    print("KERNEL_OK")
</pallas_src>

<mosaic_0001>
module attributes {stable_mosaic.version = 11 : i64} {
  func.func @_critic_kernel_fused(%arg0: i32, %arg1: memref<8x8xf32, #tpu.memory_space<vmem>>, %arg2: memref<8x4xf32, #tpu.memory_space<vmem>>, %arg3: memref<8x64xf32, #tpu.memory_space<vmem>>, %arg4: memref<4x64xf32, #tpu.memory_space<vmem>>, %arg5: memref<64x64xf32, #tpu.memory_space<vmem>>, %arg6: memref<64x2xf32, #tpu.memory_space<vmem>>, %arg7: memref<8x2xf32, #tpu.memory_space<vmem>>) attributes {dimension_semantics = [#tpu.dimension_semantics<parallel>], iteration_bounds = array<i64: 1>, scalar_prefetch = 0 : i64, scratch_operands = 0 : i64, tpu.core_type = #tpu.core_type<tc>, window_params = [{transform_indices = @transform_0, window_bounds = array<i64: 8, 8>}, {transform_indices = @transform_1, window_bounds = array<i64: 8, 4>}, {pipeline_mode = #tpu.pipeline_mode<synchronous>, transform_indices = @transform_2, window_bounds = array<i64: 8, 64>}, {pipeline_mode = #tpu.pipeline_mode<synchronous>, transform_indices = @transform_3, window_bounds = array<i64: 4, 64>}, {pipeline_mode = #tpu.pipeline_mode<synchronous>, transform_indices = @transform_4, window_bounds = array<i64: 64, 64>}, {pipeline_mode = #tpu.pipeline_mode<synchronous>, transform_indices = @transform_5, window_bounds = array<i64: 64, 2>}, {transform_indices = @transform_6, window_bounds = array<i64: 8, 2>}]} {
    %c0 = arith.constant 0 : index
    %c0_0 = arith.constant 0 : index
    %0 = vector.load %arg1[%c0, %c0_0] : memref<8x8xf32, #tpu.memory_space<vmem>>, vector<8x8xf32>
    %c0_1 = arith.constant 0 : index
    %c0_2 = arith.constant 0 : index
    %1 = vector.load %arg3[%c0_1, %c0_2] : memref<8x64xf32, #tpu.memory_space<vmem>>, vector<8x64xf32>
    %cst = arith.constant dense<0.000000e+00> : vector<8x64xf32>
    %2 = tpu.matmul %0, %1, %cst {dimension_numbers = #tpu.dot_dimension_numbers<[1], [0], [0], [1], [0, 0, 1, 1], [], []>} : vector<8x8xf32>, vector<8x64xf32>, vector<8x64xf32> -> vector<8x64xf32>
    %c0_3 = arith.constant 0 : index
    %c0_4 = arith.constant 0 : index
    %3 = vector.load %arg2[%c0_3, %c0_4] : memref<8x4xf32, #tpu.memory_space<vmem>>, vector<8x4xf32>
    %c0_5 = arith.constant 0 : index
    %c0_6 = arith.constant 0 : index
    %4 = vector.load %arg4[%c0_5, %c0_6] : memref<4x64xf32, #tpu.memory_space<vmem>>, vector<4x64xf32>
    %cst_7 = arith.constant dense<0.000000e+00> : vector<8x64xf32>
    %5 = tpu.matmul %3, %4, %cst_7 {dimension_numbers = #tpu.dot_dimension_numbers<[1], [0], [0], [1], [0, 0, 1, 1], [], []>} : vector<8x4xf32>, vector<4x64xf32>, vector<8x64xf32> -> vector<8x64xf32>
    %6 = arith.addf %2, %5 : vector<8x64xf32>
    %7 = math.tanh %6 : vector<8x64xf32>
    %8 = math.absf %7 : vector<8x64xf32>
    %c0_8 = arith.constant 0 : index
    %c0_9 = arith.constant 0 : index
    %9 = vector.load %arg5[%c0_8, %c0_9] : memref<64x64xf32, #tpu.memory_space<vmem>>, vector<64x64xf32>
    %cst_10 = arith.constant dense<0.000000e+00> : vector<8x64xf32>
    %10 = tpu.matmul %8, %9, %cst_10 {dimension_numbers = #tpu.dot_dimension_numbers<[1], [0], [0], [1], [0, 0, 1, 1], [], []>} : vector<8x64xf32>, vector<64x64xf32>, vector<8x64xf32> -> vector<8x64xf32>
    %11 = math.tanh %10 : vector<8x64xf32>
    %12 = math.absf %11 : vector<8x64xf32>
    %c0_11 = arith.constant 0 : index
    %c0_12 = arith.constant 0 : index
    %13 = vector.load %arg6[%c0_11, %c0_12] : memref<64x2xf32, #tpu.memory_space<vmem>>, vector<64x2xf32>
    %cst_13 = arith.constant dense<0.000000e+00> : vector<8x2xf32>
    %14 = tpu.matmul %12, %13, %cst_13 {dimension_numbers = #tpu.dot_dimension_numbers<[1], [0], [0], [1], [0, 0, 1, 1], [], []>} : vector<8x64xf32>, vector<64x2xf32>, vector<8x2xf32> -> vector<8x2xf32>
    %c0_14 = arith.constant 0 : index
    %c0_15 = arith.constant 0 : index
    %15 = vector.load %arg7[%c0_14, %c0_15] : memref<8x2xf32, #tpu.memory_space<vmem>>, vector<8x2xf32>
    tpu.vector_store %arg7[%c0_14, %c0_15], %14 {strides = array<i32>} : memref<8x2xf32, #tpu.memory_space<vmem>>, vector<8x2xf32>,
    return
  }
  func.func @transform_0(%arg0: i32) -> (i32, i32) {
    %c0_i32 = arith.constant 0 : i32
    %c0_i32_0 = arith.constant 0 : i32
    return %arg0, %c0_i32 : i32, i32
  }
  func.func @transform_1(%arg0: i32) -> (i32, i32) {
    %c0_i32 = arith.constant 0 : i32
    %c0_i32_0 = arith.constant 0 : i32
    return %arg0, %c0_i32 : i32, i32
  }
  func.func @transform_2(%arg0: i32) -> (i32, i32) {
    %c0_i32 = arith.constant 0 : i32
    %c0_i32_0 = arith.constant 0 : i32
    %c0_i32_1 = arith.constant 0 : i32
    return %c0_i32, %c0_i32_0 : i32, i32
  }
  func.func @transform_3(%arg0: i32) -> (i32, i32) {
    %c0_i32 = arith.constant 0 : i32
    %c0_i32_0 = arith.constant 0 : i32
    %c0_i32_1 = arith.constant 0 : i32
    return %c0_i32, %c0_i32_0 : i32, i32
  }
  func.func @transform_4(%arg0: i32) -> (i32, i32) {
    %c0_i32 = arith.constant 0 : i32
    %c0_i32_0 = arith.constant 0 : i32
    %c0_i32_1 = arith.constant 0 : i32
    return %c0_i32, %c0_i32_0 : i32, i32
  }
  func.func @transform_5(%arg0: i32) -> (i32, i32) {
    %c0_i32 = arith.constant 0 : i32
    %c0_i32_0 = arith.constant 0 : i32
    %c0_i32_1 = arith.constant 0 : i32
    return %c0_i32, %c0_i32_0 : i32, i32
  }
  func.func @transform_6(%arg0: i32) -> (i32, i32) {
    %c0_i32 = arith.constant 0 : i32
    %c0_i32_0 = arith.constant 0 : i32
    return %arg0, %c0_i32 : i32, i32
  }
}

</mosaic_0001>

<llo_original>
// kernel: tpu_custom_call.1
$region0: #{tpu_custom_call.1}
  #allocation0 [shape = 'u32[]', space=smem, size = 0x4, offset = 0x4, fixed_abs, tag = 'smem constant byte address 0x4 - core index']
  #allocation1 [shape = 'u32[72,128]{1,0:T(1,128)}', space=vmem, size = 0x9000, scoped, tag = 'internal scratch']
  %s0 = inlined_call_operand.vmem [shape: f32[8,8], index: 0, kind: input, shape index: {}]
  %s1 = inlined_call_operand.vmem [shape: f32[8,4], index: 1, kind: input, shape index: {}]
  %s2 = inlined_call_operand.hbm [shape: f32[8,64], index: 2, kind: input, shape index: {}]
  %s3 = inlined_call_operand.vmem [shape: f32[4,64], index: 3, kind: input, shape index: {}]
  %s4 = inlined_call_operand.vmem [shape: f32[64,64], index: 4, kind: input, shape index: {}]
  %s5 = inlined_call_operand.vmem [shape: f32[64,2], index: 5, kind: input, shape index: {}]
  %s6 = inlined_call_operand.vmem [shape: f32[8,2], index: 6, kind: output, shape index: {}]
  %s7 = sld [smem:[#allocation0]]
  $region38: #{tpu_custom_call.1} parent=0
    _
  %s9 = ssub.s32 1, %s7
  %s10 = scalar_select 0, %s9, %s7
  $region1: #{tpu_custom_call.1} parent=0
    #allocation2 [shape = 'u8[4096]{0}', space=vmem, size = 0x1000, scoped, tag = 'input window, operand 2, single buffered']
    #allocation3 [shape = 's32[1]{0}', space=sflag, size = 0x4, scoped, tag = 'scoped memory for tpu_custom_call.1']
    %11 = vsyncpa [#allocation3], 0
    // Predicated region
    $region2: #{tpu_custom_call.1} parent=1 // pred_check
      _
    $region3: #{tpu_custom_call.1} parent=1 // pred_check_branch
      %13 = sbr.rel (0) target = $region5
    $region4: #{tpu_custom_call.1} parent=1 // pred_region
      _
    $region5: #{tpu_custom_call.1} parent=1 // pred_fallthru
      _
    // Predicated region
    $region6: #{tpu_custom_call.1} parent=1 // pred_check
      _
    $region7: #{tpu_custom_call.1} parent=1 // pred_check_branch
      %15 = sbr.rel (0) target = $region9
    $region8: #{tpu_custom_call.1} parent=1 // pred_region
      _
    $region9: #{tpu_custom_call.1} parent=1 // pred_fallthru
      _
    // Predicated region
    $region10: #{tpu_custom_call.1} parent=1 // pred_check
      _
    $region11: #{tpu_custom_call.1} parent=1 // pred_check_branch
      %17 = sbr.rel (0) target = $region13
    $region12: #{tpu_custom_call.1} parent=1 // pred_region
      %19 = vsyncadd [#allocation3], 0
      %s21 = sshll.u32 %s2, 4
      %s22 = int_to_ptr.hbm [resolvable:$true] %s21
      %s23 = sshll.u32 [#allocation2], 4
      %s24 = int_to_ptr.vmem [resolvable:$true] %s23
      %26 = dma.hbm_to_vmem [thread:$0]  %s22, 128, %s24, [#allocation3]
    $region13: #{tpu_custom_call.1} parent=1 // pred_fallthru
      _
    // Predicated region
    $region14: #{tpu_custom_call.1} parent=1 // pred_check
      _
    $region15: #{tpu_custom_call.1} parent=1 // pred_check_branch
      %28 = sbr.rel (0) target = $region17
    $region16: #{tpu_custom_call.1} parent=1 // pred_region
      _
    $region17: #{tpu_custom_call.1} parent=1 // pred_fallthru
      _
    // Predicated region
    $region18: #{tpu_custom_call.1} parent=1 // pred_check
      _
    $region19: #{tpu_custom_call.1} parent=1 // pred_check_branch
      %30 = sbr.rel (0) target = $region21
    $region20: #{tpu_custom_call.1} parent=1 // pred_region
      _
    $region21: #{tpu_custom_call.1} parent=1 // pred_fallthru
      _
    // Predicated region
    $region22: #{tpu_custom_call.1} parent=1 // pred_check
      _
    $region23: #{tpu_custom_call.1} parent=1 // pred_check_branch
      %32 = sbr.rel (0) target = $region25
    $region24: #{tpu_custom_call.1} parent=1 // pred_region
      _
    $region25: #{tpu_custom_call.1} parent=1 // pred_fallthru
      _
    // Predicated region
    $region26: #{tpu_custom_call.1} parent=1 // pred_check
      _
    $region27: #{tpu_custom_call.1} parent=1 // pred_check_branch
      %34 = sbr.rel (0) target = $region29
    $region28: #{tpu_custom_call.1} parent=1 // pred_region
      %36 = dma.done [#allocation3], 128
    $region29: #{tpu_custom_call.1} parent=1 // pred_fallthru
      _
    %v37 = vld [vmem:[%s0] sm:$0xff]
    %v38 = vld [vmem:[#allocation2] sm:$0xff]
    %v39 = vld [vmem:[%s1] sm:$0xff]
    %v40 = vld [vmem:[%s3] sm:$0xf]
    %vm41 = vcmask 31744
    %v43 = vsel %vm41, %v39, 0
    %vm45 = vcmask 1043456
    %v47 = vsel %vm45, %v40, 0
    %49 = vmatpush.msra.mxu0 0.0
    %50 = vmatpush.msra.mxu0 0.0
    %51 = vmatpush.msra.mxu0 0.0
    %52 = vmatpush.msra.mxu0 0.0
    %53 = vmatpush.msra.mxu0 0.0
    %54 = vmatpush.msra.mxu0 0.0
    %55 = vmatpush.msra.mxu0 0.0
    %56 = vmatpush.msra.mxu0 0.0
    %57 = vmatpush.msra.mxu0 0.0
    %58 = vmatpush.msra.mxu0 0.0
    %59 = vmatpush.msra.mxu0 0.0
    %60 = vmatpush.msra.mxu0 0.0
    %61 = vmatpush.msra.mxu0 0.0
    %62 = vmatpush.msra.mxu0 0.0
    %63 = vmatpush.msra.mxu0 0.0
    %64 = vmatpush.msra.mxu0 %v47
    %65 = vmatmul.f32.gmra.mxu0 %v43
    %v66 = vpop.f32.mrf.mxu0
    %v67 = vadd.f32 0.0, %v66
    %68 = vdwg.mxu0
    %vm69 = vcmask 64512
    %v71 = vsel %vm69, %v37, 0
    %73 = vmatpush.msra.mxu0 0.0
    %74 = vmatpush.msra.mxu0 0.0
    %75 = vmatpush.msra.mxu0 0.0
    %76 = vmatpush.msra.mxu0 0.0
    %77 = vmatpush.msra.mxu0 0.0
    %78 = vmatpush.msra.mxu0 0.0
    %79 = vmatpush.msra.mxu0 0.0
    %80 = vmatpush.msra.mxu0 0.0
    %81 = vmatpush.msra.mxu0 0.0
    %82 = vmatpush.msra.mxu0 0.0
    %83 = vmatpush.msra.mxu0 0.0
    %84 = vmatpush.msra.mxu0 0.0
    %85 = vmatpush.msra.mxu0 0.0
    %86 = vmatpush.msra.mxu0 0.0
    %87 = vmatpush.msra.mxu0 0.0
    %88 = vmatpush.msra.mxu0 %v38
    %89 = vmatmul.f32.gmra.mxu0 %v71
    %v90 = vpop.f32.mrf.mxu0
    %v91 = vadd.f32 %v67, %v90
    %92 = vdwg.mxu0
    %v93 = vtanh.pop %v91
    %v94 = vand.u32 2147483647, %v93
    %v95 = vld [vmem:[%s4] sm:$0xff]
    %v96 = vld [vmem:[%s4 + $0x8] sm:$0xff]
    %v97 = vld [vmem:[%s4 + $0x10] sm:$0xff]
    %v98 = vld [vmem:[%s4 + $0x18] sm:$0xff]
    %v99 = vld [vmem:[%s4 + $0x20] sm:$0xff]
    %v100 = vld [vmem:[%s4 + $0x28] sm:$0xff]
    %v101 = vld [vmem:[%s4 + $0x30] sm:$0xff]
    %v102 = vld [vmem:[%s4 + $0x38] sm:$0xff]
    %vm103 = vcmask 523264
    %v105 = vsel %vm103, %v94, 0
    %107 = vmatpush.msra.mxu0 0.0
    %108 = vmatpush.msra.mxu0 0.0
    %109 = vmatpush.msra.mxu0 0.0
    %110 = vmatpush.msra.mxu0 0.0
    %111 = vmatpush.msra.mxu0 0.0
    %112 = vmatpush.msra.mxu0 0.0
    %113 = vmatpush.msra.mxu0 0.0
    %114 = vmatpush.msra.mxu0 0.0
    %115 = vmatpush.msra.mxu0 %v102
    %116 = vmatpush.msra.mxu0 %v101
    %117 = vmatpush.msra.mxu0 %v100
    %118 = vmatpush.msra.mxu0 %v99
    %119 = vmatpush.msra.mxu0 %v98
    %120 = vmatpush.msra.mxu0 %v97
    %121 = vmatpush.msra.mxu0 %v96
    %122 = vmatpush.msra.mxu0 %v95
    %123 = vmatmul.f32.gmra.mxu0 %v105
    %v124 = vpop.f32.mrf.mxu0
    %v125 = vadd.f32 0.0, %v124
    %126 = vdwg.mxu0
    %v127 = vtanh.pop %v125
    %v128 = vand.u32 2147483647, %v127
    %v129 = vld [vmem:[%s5] sm:$0xff]
    %v130 = vld [vmem:[%s5 + $0x8] sm:$0xff]
    %v131 = vld [vmem:[%s5 + $0x10] sm:$0xff]
    %v132 = vld [vmem:[%s5 + $0x18] sm:$0xff]
    %v133 = vld [vmem:[%s5 + $0x20] sm:$0xff]
    %v134 = vld [vmem:[%s5 + $0x28] sm:$0xff]
    %v135 = vld [vmem:[%s5 + $0x30] sm:$0xff]
    %v136 = vld [vmem:[%s5 + $0x38] sm:$0xff]
    %v138 = vsel %vm103, %v128, 0
    %140 = vmatpush.msra.mxu0 0.0
    %141 = vmatpush.msra.mxu0 0.0
    %142 = vmatpush.msra.mxu0 0.0
    %143 = vmatpush.msra.mxu0 0.0
    %144 = vmatpush.msra.mxu0 0.0
    %145 = vmatpush.msra.mxu0 0.0
    %146 = vmatpush.msra.mxu0 0.0
    %147 = vmatpush.msra.mxu0 0.0
    %148 = vmatpush.msra.mxu0 %v136
    %149 = vmatpush.msra.mxu0 %v135
    %150 = vmatpush.msra.mxu0 %v134
    %151 = vmatpush.msra.mxu0 %v133
    %152 = vmatpush.msra.mxu0 %v132
    %153 = vmatpush.msra.mxu0 %v131
    %154 = vmatpush.msra.mxu0 %v130
    %155 = vmatpush.msra.mxu0 %v129
    %156 = vmatmul.f32.gmra.mxu0 %v138
    %v157 = vpop.f32.mrf.mxu0
    %v158 = vadd.f32 0.0, %v157
    %159 = vdwg.mxu0
    %vm160 = vcmask 15360
    %161 = vst.msk [vmem:[%s6] sm:$0xff] %vm160, %v158
    // Predicated region
    $region30: #{tpu_custom_call.1} parent=1 // pred_check
      _
    $region31: #{tpu_custom_call.1} parent=1 // pred_check_branch
      %163 = sbr.rel (0) target = $region33
    $region32: #{tpu_custom_call.1} parent=1 // pred_region
      _
    $region33: #{tpu_custom_call.1} parent=1 // pred_fallthru
      _
    // Predicated region
    $region34: #{tpu_custom_call.1} parent=1 // pred_check
      _
    $region35: #{tpu_custom_call.1} parent=1 // pred_check_branch
      %165 = sbr.rel (0) target = $region37
    $region36: #{tpu_custom_call.1} parent=1 // pred_region
      _
    $region37: #{tpu_custom_call.1} parent=1 // pred_fallthru
      _
    %166 = vsyncpa [#allocation3], 1

</llo_original>
